<compile_context>
chip_gen: v7x
topology: tpu7x:2x2x1
jax: 0.10.0
libtpu: 0.0.40
codegen_flags: <defaults>
</compile_context>

<pallas_src>
import jax
import jax.numpy as jnp
from jax.experimental import pallas as pl
from jax.experimental.pallas import tpu as pltpu

N = 1
C_IN = 44
C_OUT = 1056


def conv1x1_sigmoid_kernel(x_ref, w_ref, b_ref, o_ref):
    # x_ref: (M, C_IN) f32, w_ref: (C_IN, C_OUT) bf16,
    # b_ref: (1, C_OUT) f32,  o_ref: (M, C_OUT) f32
    x = x_ref[...]                                  # keep activation in f32
    w = w_ref[...].astype(jnp.float32)              # tiny VPU upcast (44x1056)
    acc = jnp.dot(x, w, preferred_element_type=jnp.float32)
    acc = acc + b_ref[...]                          # bias add in f32
    o_ref[...] = jax.nn.sigmoid(acc).astype(o_ref.dtype)


def prepare_params(weight_oihw, bias):
    """One-time parameter prep (NOT in the per-call hot path).

    weight_oihw: (C_OUT, C_IN, 1, 1) f32 -> (C_IN, C_OUT) bf16 (contraction-major)
    bias:        (C_OUT,)            f32 -> (1, C_OUT)     f32
    """
    w2d = weight_oihw.reshape(C_OUT, C_IN).T.astype(jnp.bfloat16)  # (C_IN, C_OUT)
    b2d = bias.reshape(1, C_OUT).astype(jnp.float32)
    return w2d, b2d


def conv1x1_sigmoid(x_nchw, w2d, b2d):
    """x_nchw: (N, C_IN, 1, 1); w2d/b2d: outputs of prepare_params."""
    n, cin, h, w = x_nchw.shape
    assert (h, w) == (1, 1) and cin == C_IN

    m = n * h * w
    x2d = x_nchw.reshape(m, cin)  # (M, C_IN)

    cost = pl.CostEstimate(
        flops=2 * m * C_IN * C_OUT,
        transcendentals=m * C_OUT,
        bytes_accessed=(m * C_IN * 4            # x  (f32)
                        + C_IN * C_OUT * 2      # W  (bf16)
                        + C_OUT * 4             # b  (f32)
                        + m * C_OUT * 4),       # out (f32)
    )

    y2d = pl.pallas_call(
        conv1x1_sigmoid_kernel,
        out_shape=jax.ShapeDtypeStruct((m, C_OUT), jnp.float32),
        in_specs=[
            pl.BlockSpec(memory_space=pltpu.MemorySpace.VMEM),  # x  (whole array)
            pl.BlockSpec(memory_space=pltpu.MemorySpace.VMEM),  # W  (whole array)
            pl.BlockSpec(memory_space=pltpu.MemorySpace.VMEM),  # b  (whole array)
        ],
        out_specs=pl.BlockSpec(memory_space=pltpu.MemorySpace.VMEM),
        cost_estimate=cost,
    )(x2d, w2d, b2d)

    return y2d.reshape(n, C_OUT, 1, 1)


if __name__ == "__main__":
    key = jax.random.PRNGKey(0)
    k_x, k_w, k_b = jax.random.split(key, 3)

    # Input consistent with the module's forward: [1, 44, 1, 1]
    x = jax.random.normal(k_x, (N, C_IN, 1, 1), dtype=jnp.float32)

    # Deterministic parameter init (PyTorch Conv2d weight shape: [C_OUT, C_IN, 1, 1])
    fan_in = C_IN  # 1x1 kernel
    bound = 1.0 / (fan_in ** 0.5)
    weight = jax.random.uniform(k_w, (C_OUT, C_IN, 1, 1), dtype=jnp.float32,
                                minval=-bound, maxval=bound)
    bias = jax.random.uniform(k_b, (C_OUT,), dtype=jnp.float32,
                              minval=-bound, maxval=bound)

    # One-time prep (outside the hot path); materialize before use.
    w2d, b2d = prepare_params(weight, bias)
    w2d, b2d = jax.block_until_ready((w2d, b2d))

    fwd = jax.jit(conv1x1_sigmoid)
    out = fwd(x, w2d, b2d)
    jax.block_until_ready(out)

    # Reference check: f32 activation, bf16-quantized weight, f32 accumulate.
    w_ref = w2d.astype(jnp.float32)                               # (C_IN, C_OUT)
    ref_q = jax.nn.sigmoid(
        x.reshape(N, C_IN) @ w_ref + bias[None, :]
    ).reshape(N, C_OUT, 1, 1)
    assert jnp.allclose(out, ref_q, atol=1e-4, rtol=1e-4), "mismatch vs bf16-weight reference"

    # Sanity vs full-f32 math (bounded sigmoid output; bf16 weight error only).
    ref_f32 = jax.nn.sigmoid(
        x.reshape(N, C_IN) @ weight.reshape(C_OUT, C_IN).T + bias[None, :]
    ).reshape(N, C_OUT, 1, 1)
    assert jnp.allclose(out, ref_f32, atol=5e-3), "mismatch vs f32 reference"

    print("KERNEL_OK")
</pallas_src>

<mosaic_0001>
module attributes {stable_mosaic.version = 11 : i64} {
  func.func @conv1x1_sigmoid_kernel(%arg0: memref<1x44xf32, #tpu.memory_space<vmem>>, %arg1: memref<44x1056xbf16, #tpu.memory_space<vmem>>, %arg2: memref<1x1056xf32, #tpu.memory_space<vmem>>, %arg3: memref<1x1056xf32, #tpu.memory_space<vmem>>) attributes {dimension_semantics = [], scalar_prefetch = 0 : i64, scratch_operands = 0 : i64, tpu.core_type = #tpu.core_type<tc>} {
    %c0 = arith.constant 0 : index
    %c0_0 = arith.constant 0 : index
    %0 = vector.load %arg0[%c0, %c0_0] : memref<1x44xf32, #tpu.memory_space<vmem>>, vector<1x44xf32>
    %c0_1 = arith.constant 0 : index
    %c0_2 = arith.constant 0 : index
    %1 = vector.load %arg1[%c0_1, %c0_2] : memref<44x1056xbf16, #tpu.memory_space<vmem>>, vector<44x1056xbf16>
    %2 = arith.extf %1 : vector<44x1056xbf16> to vector<44x1056xf32>
    %cst = arith.constant dense<0.000000e+00> : vector<1x1056xf32>
    %3 = tpu.matmul %0, %2, %cst {dimension_numbers = #tpu.dot_dimension_numbers<[1], [0], [0], [1], [0, 0, 1, 1], [], []>} : vector<1x44xf32>, vector<44x1056xf32>, vector<1x1056xf32> -> vector<1x1056xf32>
    %c0_3 = arith.constant 0 : index
    %c0_4 = arith.constant 0 : index
    %4 = vector.load %arg2[%c0_3, %c0_4] : memref<1x1056xf32, #tpu.memory_space<vmem>>, vector<1x1056xf32>
    %5 = arith.addf %3, %4 : vector<1x1056xf32>
    %6 = arith.negf %5 : vector<1x1056xf32>
    %7 = math.exp %6 : vector<1x1056xf32>
    %cst_5 = arith.constant 1.000000e+00 : f32
    %8 = vector.broadcast %cst_5 : f32 to vector<1x1056xf32>
    %9 = arith.addf %8, %7 : vector<1x1056xf32>
    %10 = arith.divf %8, %9 : vector<1x1056xf32>
    %c0_6 = arith.constant 0 : index
    %c0_7 = arith.constant 0 : index
    %11 = vector.load %arg3[%c0_6, %c0_7] : memref<1x1056xf32, #tpu.memory_space<vmem>>, vector<1x1056xf32>
    tpu.vector_store %arg3[%c0_6, %c0_7], %10 {strides = array<i32>} : memref<1x1056xf32, #tpu.memory_space<vmem>>, vector<1x1056xf32>,
    return
  }
}

</mosaic_0001>

<llo_original>
// kernel: conv1x1_sigmoid.1
$region0: #{conv1x1_sigmoid.1}
  #allocation0 [shape = 'u32[]', space=smem, size = 0x4, offset = 0x4, fixed_abs, tag = 'smem constant byte address 0x4 - core index']
  #allocation1 [shape = 'u32[144,128]{1,0:T(1,128)}', space=vmem, size = 0x12000, scoped, tag = 'internal scratch']
  %s0 = inlined_call_operand.vmem [shape: f32[1,44], index: 0, kind: input, shape index: {}]
  %s1 = inlined_call_operand.hbm [shape: bf16[44,1056], index: 1, kind: input, shape index: {}]
  %s2 = inlined_call_operand.vmem [shape: f32[1,1056], index: 2, kind: input, shape index: {}]
  %s3 = inlined_call_operand.hbm [shape: f32[1,1056], index: 3, kind: output, shape index: {}]
  %s4 = sld [smem:[#allocation0]]
  $region26: #{conv1x1_sigmoid.1} parent=0
    _
  %s6 = ssub.s32 1, %s4
  %s7 = scalar_select 0, %s6, %s4
  $region1: #{conv1x1_sigmoid.1} parent=0
    #allocation2 [shape = 'u8[110592]{0}', space=vmem, size = 0x1b000, scoped, tag = 'input window, operand 1, single buffered']
    #allocation3 [shape = 's32[1]{0}', space=sflag, size = 0x4, scoped, tag = 'scoped memory for conv1x1_sigmoid.1']
    #allocation4 [shape = 's32[1]{0}', space=sflag, size = 0x4, scoped, tag = 'scoped memory for conv1x1_sigmoid.1']
    #allocation5 [shape = 'u8[4608]{0}', space=vmem, size = 0x1400, scoped, tag = 'output window, operand 0, single buffered']
    %8 = vsyncpa [#allocation3], 0
    %9 = vsyncpa [#allocation4], 0
    // Predicated region
    $region2: #{conv1x1_sigmoid.1} parent=1 // pred_check
      _
    $region3: #{conv1x1_sigmoid.1} parent=1 // pred_check_branch
      %11 = sbr.rel (0) target = $region5
    $region4: #{conv1x1_sigmoid.1} parent=1 // pred_region
      _
    $region5: #{conv1x1_sigmoid.1} parent=1 // pred_fallthru
      _
    // Predicated region
    $region6: #{conv1x1_sigmoid.1} parent=1 // pred_check
      _
    $region7: #{conv1x1_sigmoid.1} parent=1 // pred_check_branch
      %13 = sbr.rel (0) target = $region9
    $region8: #{conv1x1_sigmoid.1} parent=1 // pred_region
      %s15 = ssub.s32 3456, 3456
      %16 = vsyncadd [#allocation3], %s15
      %s17 = sshll.u32 [#allocation2], 4
      %s18 = int_to_ptr.vmem [resolvable:$true] %s17
      %23 = dma.hbm_to_vmem [thread:$0]  %s1, 3456, %s18, [#allocation3], 576, 576, 36
    $region9: #{conv1x1_sigmoid.1} parent=1 // pred_fallthru
      _
    // Predicated region
    $region10: #{conv1x1_sigmoid.1} parent=1 // pred_check
      _
    $region11: #{conv1x1_sigmoid.1} parent=1 // pred_check_branch
      %25 = sbr.rel (0) target = $region13
    $region12: #{conv1x1_sigmoid.1} parent=1 // pred_region
      _
    $region13: #{conv1x1_sigmoid.1} parent=1 // pred_fallthru
      _
    // Predicated region
    $region14: #{conv1x1_sigmoid.1} parent=1 // pred_check
      _
    $region15: #{conv1x1_sigmoid.1} parent=1 // pred_check_branch
      %27 = sbr.rel (0) target = $region17
    $region16: #{conv1x1_sigmoid.1} parent=1 // pred_region
      %28 = dma.done [#allocation3], 3456
    $region17: #{conv1x1_sigmoid.1} parent=1 // pred_fallthru
      _
    %v29 = vld [vmem:[%s0] sm:$0x1]
    %v30 = vld [vmem:[#allocation2] sm:$0xff]
    %v31 = vld [vmem:[#allocation2 + $0x8] sm:$0xff]
    %v32 = vld [vmem:[#allocation2 + $0x10] sm:$0xff]
    %v33 = vld [vmem:[#allocation2 + $0x18] sm:$0xff]
    %v34 = vld [vmem:[#allocation2 + $0x20] sm:$0xf]
    %v35 = vld [vmem:[#allocation2 + $0x24] sm:$0xff]
    %v36 = vld [vmem:[#allocation2 + $0x2c] sm:$0xff]
    %v37 = vld [vmem:[#allocation2 + $0x34] sm:$0xff]
    %v38 = vld [vmem:[#allocation2 + $0x3c] sm:$0xff]
    %v39 = vld [vmem:[#allocation2 + $0x44] sm:$0xf]
    %v40 = vld [vmem:[#allocation2 + $0x48] sm:$0xff]
    %v41 = vld [vmem:[#allocation2 + $0x50] sm:$0xff]
    %v42 = vld [vmem:[#allocation2 + $0x58] sm:$0xff]
    %v43 = vld [vmem:[#allocation2 + $0x60] sm:$0xff]
    %v44 = vld [vmem:[#allocation2 + $0x68] sm:$0xf]
    %v45 = vld [vmem:[#allocation2 + $0x6c] sm:$0xff]
    %v46 = vld [vmem:[#allocation2 + $0x74] sm:$0xff]
    %v47 = vld [vmem:[#allocation2 + $0x7c] sm:$0xff]
    %v48 = vld [vmem:[#allocation2 + $0x84] sm:$0xff]
    %v49 = vld [vmem:[#allocation2 + $0x8c] sm:$0xf]
    %v50 = vld [vmem:[#allocation2 + $0x90] sm:$0xff]
    %v51 = vld [vmem:[#allocation2 + $0x98] sm:$0xff]
    %v52 = vld [vmem:[#allocation2 + $0xa0] sm:$0xff]
    %v53 = vld [vmem:[#allocation2 + $0xa8] sm:$0xff]
    %v54 = vld [vmem:[#allocation2 + $0xb0] sm:$0xf]
    %v55 = vld [vmem:[#allocation2 + $0xb4] sm:$0x33]
    %v56 = vld [vmem:[#allocation2 + $0xbc] sm:$0x33]
    %v57 = vld [vmem:[#allocation2 + $0xc4] sm:$0x33]
    %v58 = vld [vmem:[#allocation2 + $0xcc] sm:$0x33]
    %v59 = vld [vmem:[#allocation2 + $0xd4] sm:$0x3]
    %v60 = vunpack.c.l.bf16 %v30
    %v61 = vunpack.c.h.bf16 %v30
    %v62 = vunpack.c.l.bf16 %v31
    %v63 = vunpack.c.h.bf16 %v31
    %v64 = vunpack.c.l.bf16 %v32
    %v65 = vunpack.c.h.bf16 %v32
    %v66 = vunpack.c.l.bf16 %v33
    %v67 = vunpack.c.h.bf16 %v33
    %v68 = vunpack.c.l.bf16 %v34
    %v69 = vunpack.c.l.bf16 %v35
    %v70 = vunpack.c.h.bf16 %v35
    %v71 = vunpack.c.l.bf16 %v36
    %v72 = vunpack.c.h.bf16 %v36
    %v73 = vunpack.c.l.bf16 %v37
    %v74 = vunpack.c.h.bf16 %v37
    %v75 = vunpack.c.l.bf16 %v38
    %v76 = vunpack.c.h.bf16 %v38
    %v77 = vunpack.c.l.bf16 %v39
    %v78 = vunpack.c.l.bf16 %v40
    %v79 = vunpack.c.h.bf16 %v40
    %v80 = vunpack.c.l.bf16 %v41
    %v81 = vunpack.c.h.bf16 %v41
    %v82 = vunpack.c.l.bf16 %v42
    %v83 = vunpack.c.h.bf16 %v42
    %v84 = vunpack.c.l.bf16 %v43
    %v85 = vunpack.c.h.bf16 %v43
    %v86 = vunpack.c.l.bf16 %v44
    %v87 = vunpack.c.l.bf16 %v45
    %v88 = vunpack.c.h.bf16 %v45
    %v89 = vunpack.c.l.bf16 %v46
    %v90 = vunpack.c.h.bf16 %v46
    %v91 = vunpack.c.l.bf16 %v47
    %v92 = vunpack.c.h.bf16 %v47
    %v93 = vunpack.c.l.bf16 %v48
    %v94 = vunpack.c.h.bf16 %v48
    %v95 = vunpack.c.l.bf16 %v49
    %v96 = vunpack.c.l.bf16 %v50
    %v97 = vunpack.c.h.bf16 %v50
    %v98 = vunpack.c.l.bf16 %v51
    %v99 = vunpack.c.h.bf16 %v51
    %v100 = vunpack.c.l.bf16 %v52
    %v101 = vunpack.c.h.bf16 %v52
    %v102 = vunpack.c.l.bf16 %v53
    %v103 = vunpack.c.h.bf16 %v53
    %v104 = vunpack.c.l.bf16 %v54
    %v105 = vunpack.c.l.bf16 %v55
    %v106 = vunpack.c.h.bf16 %v55
    %v107 = vunpack.c.l.bf16 %v56
    %v108 = vunpack.c.h.bf16 %v56
    %v109 = vunpack.c.l.bf16 %v57
    %v110 = vunpack.c.h.bf16 %v57
    %v111 = vunpack.c.l.bf16 %v58
    %v112 = vunpack.c.h.bf16 %v58
    %v113 = vunpack.c.l.bf16 %v59
    %v114 = vld [vmem:[%s2] sm:$0xff]
    %v115 = vld [vmem:[%s2 + $0x8] sm:$0x1]
    %v118 = vlaneseq
    %v119 = vshrl.u32 %v118, 7
    %v120 = vsub.s32 0, %v119
    %v121 = vrot.slane %v114, %v120
    %v122 = vlaneseq
    %v123 = vshrl.u32 %v122, 7
    %v124 = vsub.s32 1, %v123
    %v125 = vrot.slane %v114, %v124
    %v126 = vlaneseq
    %v127 = vshrl.u32 %v126, 7
    %v128 = vsub.s32 2, %v127
    %v129 = vrot.slane %v114, %v128
    %v130 = vlaneseq
    %v131 = vshrl.u32 %v130, 7
    %v132 = vsub.s32 3, %v131
    %v133 = vrot.slane %v114, %v132
    %v134 = vlaneseq
    %v135 = vshrl.u32 %v134, 7
    %v136 = vsub.s32 4, %v135
    %v137 = vrot.slane %v114, %v136
    %v138 = vlaneseq
    %v139 = vshrl.u32 %v138, 7
    %v140 = vsub.s32 5, %v139
    %v141 = vrot.slane %v114, %v140
    %v142 = vlaneseq
    %v143 = vshrl.u32 %v142, 7
    %v144 = vsub.s32 6, %v143
    %v145 = vrot.slane %v114, %v144
    %v146 = vlaneseq
    %v147 = vshrl.u32 %v146, 7
    %v148 = vsub.s32 7, %v147
    %v149 = vrot.slane %v114, %v148
    %v150 = vlaneseq
    %v151 = vshrl.u32 %v150, 7
    %v152 = vsub.s32 0, %v151
    %v153 = vrot.slane %v115, %v152
    %vm163 = vcmask 359424
    %v165 = vsel %vm163, %v29, 0
    %vm167 = vcmask 1043456
    %v169 = vsel %vm167, %v105, 0
    %v172 = vsel %vm167, %v106, 0
    %v175 = vsel %vm167, %v107, 0
    %v178 = vsel %vm167, %v108, 0
    %v181 = vsel %vm167, %v109, 0
    %v184 = vsel %vm167, %v110, 0
    %v187 = vsel %vm167, %v111, 0
    %v190 = vsel %vm167, %v112, 0
    %v193 = vsel %vm167, %v113, 0
    %195 = vmatprep.subr.mxu0 %v61
    %196 = vmatpush1.msra.mxu0 %v60
    %197 = vmatprep.subr.mxu0 %v70
    %198 = vmatpush1.msra.mxu0 %v69
    %199 = vmatprep.subr.mxu0 %v79
    %200 = vmatpush1.msra.mxu0 %v78
    %201 = vmatprep.subr.mxu0 %v88
    %202 = vmatpush1.msra.mxu0 %v87
    %203 = vmatprep.subr.mxu0 %v97
    %204 = vmatpush1.msra.mxu0 %v96
    %205 = vmatprep.subr.mxu0 %v172
    %206 = vmatpush1.msra.mxu0 %v169
    %207 = vmatprep.subr.mxu0 0.0
    %208 = vmatpush1.msra.mxu0 0.0
    %209 = vmatprep.subr.mxu0 0.0
    %210 = vmatpush1.msra.mxu0 0.0
    %211 = vmatprep.subr.mxu0 0.0
    %212 = vmatpush1.msra.mxu0 0.0
    %213 = vmatprep.subr.mxu0 0.0
    %214 = vmatpush1.msra.mxu0 0.0
    %215 = vmatprep.subr.mxu0 0.0
    %216 = vmatpush1.msra.mxu0 0.0
    %217 = vmatprep.subr.mxu0 0.0
    %218 = vmatpush1.msra.mxu0 0.0
    %219 = vmatprep.subr.mxu0 0.0
    %220 = vmatpush1.msra.mxu0 0.0
    %221 = vmatprep.subr.mxu0 0.0
    %222 = vmatpush1.msra.mxu0 0.0
    %223 = vmatprep.subr.mxu0 0.0
    %224 = vmatpush1.msra.mxu0 0.0
    %225 = vmatprep.subr.mxu0 0.0
    %226 = vmatpush1.msra.mxu0 0.0
    %227 = vmatprep.subr.mxu0 0.0
    %228 = vmatpush1.msra.mxu0 0.0
    %229 = vmatprep.subr.mxu0 0.0
    %230 = vmatpush1.msra.mxu0 0.0
    %231 = vmatprep.subr.mxu0 0.0
    %232 = vmatpush1.msra.mxu0 0.0
    %233 = vmatprep.subr.mxu0 0.0
    %234 = vmatpush1.msra.mxu0 0.0
    %235 = vmatprep.subr.mxu0 0.0
    %236 = vmatpush1.msra.mxu0 0.0
    %237 = vmatprep.subr.mxu0 0.0
    %238 = vmatpush1.msra.mxu0 0.0
    %239 = vmatprep.subr.mxu0 0.0
    %240 = vmatpush1.msra.mxu0 0.0
    %241 = vmatprep.subr.mxu0 0.0
    %242 = vmatpush1.msra.mxu0 0.0
    %243 = vmatprep.subr.mxu0 0.0
    %244 = vmatpush1.msra.mxu0 0.0
    %245 = vmatprep.subr.mxu0 0.0
    %246 = vmatpush1.msra.mxu0 0.0
    %247 = vmatprep.subr.mxu0 0.0
    %248 = vmatpush1.msra.mxu0 0.0
    %249 = vmatprep.subr.mxu0 0.0
    %250 = vmatpush1.msra.mxu0 0.0
    %251 = vmatprep.subr.mxu0 0.0
    %252 = vmatpush1.msra.mxu0 0.0
    %253 = vmatprep.subr.mxu0 0.0
    %254 = vmatpush1.msra.mxu0 0.0
    %255 = vmatprep.subr.mxu0 0.0
    %256 = vmatpush1.msra.mxu0 0.0
    %257 = vmatprep.subr.mxu0 0.0
    %258 = vmatpush1.msra.mxu0 0.0
    %259 = vmatprep.mubr.f32.mxu0 0.0
    %260 = vmatmul.mubr.f32.gmra.mrb[0].mxu0 %v165
    %v261 = vpop.f32.mrb[0].mxu0
    %v262 = vadd.f32 %v121, %v261
    %v263 = vpop.f32.mrb[0].mxu0
    %v264 = vadd.f32 %v125, %v263
    %265 = vdwg.mxu0
    %266 = vmatprep.subr.mxu0 %v63
    %267 = vmatpush1.msra.mxu0 %v62
    %268 = vmatprep.subr.mxu0 %v72
    %269 = vmatpush1.msra.mxu0 %v71
    %270 = vmatprep.subr.mxu0 %v81
    %271 = vmatpush1.msra.mxu0 %v80
    %272 = vmatprep.subr.mxu0 %v90
    %273 = vmatpush1.msra.mxu0 %v89
    %274 = vmatprep.subr.mxu0 %v99
    %275 = vmatpush1.msra.mxu0 %v98
    %276 = vmatprep.subr.mxu0 %v178
    %277 = vmatpush1.msra.mxu0 %v175
    %278 = vmatprep.subr.mxu0 0.0
    %279 = vmatpush1.msra.mxu0 0.0
    %280 = vmatprep.subr.mxu0 0.0
    %281 = vmatpush1.msra.mxu0 0.0
    %282 = vmatprep.subr.mxu0 0.0
    %283 = vmatpush1.msra.mxu0 0.0
    %284 = vmatprep.subr.mxu0 0.0
    %285 = vmatpush1.msra.mxu0 0.0
    %286 = vmatprep.subr.mxu0 0.0
    %287 = vmatpush1.msra.mxu0 0.0
    %288 = vmatprep.subr.mxu0 0.0
    %289 = vmatpush1.msra.mxu0 0.0
    %290 = vmatprep.subr.mxu0 0.0
    %291 = vmatpush1.msra.mxu0 0.0
    %292 = vmatprep.subr.mxu0 0.0
    %293 = vmatpush1.msra.mxu0 0.0
    %294 = vmatprep.subr.mxu0 0.0
    %295 = vmatpush1.msra.mxu0 0.0
    %296 = vmatprep.subr.mxu0 0.0
    %297 = vmatpush1.msra.mxu0 0.0
    %298 = vmatprep.subr.mxu0 0.0
    %299 = vmatpush1.msra.mxu0 0.0
    %300 = vmatprep.subr.mxu0 0.0
    %301 = vmatpush1.msra.mxu0 0.0
    %302 = vmatprep.subr.mxu0 0.0
    %303 = vmatpush1.msra.mxu0 0.0
    %304 = vmatprep.subr.mxu0 0.0
    %305 = vmatpush1.msra.mxu0 0.0
    %306 = vmatprep.subr.mxu0 0.0
    %307 = vmatpush1.msra.mxu0 0.0
    %308 = vmatprep.subr.mxu0 0.0
    %309 = vmatpush1.msra.mxu0 0.0
    %310 = vmatprep.subr.mxu0 0.0
    %311 = vmatpush1.msra.mxu0 0.0
    %312 = vmatprep.subr.mxu0 0.0
    %313 = vmatpush1.msra.mxu0 0.0
    %314 = vmatprep.subr.mxu0 0.0
    %315 = vmatpush1.msra.mxu0 0.0
    %316 = vmatprep.subr.mxu0 0.0
    %317 = vmatpush1.msra.mxu0 0.0
    %318 = vmatprep.subr.mxu0 0.0
    %319 = vmatpush1.msra.mxu0 0.0
    %320 = vmatprep.subr.mxu0 0.0
    %321 = vmatpush1.msra.mxu0 0.0
    %322 = vmatprep.subr.mxu0 0.0
    %323 = vmatpush1.msra.mxu0 0.0
    %324 = vmatprep.subr.mxu0 0.0
    %325 = vmatpush1.msra.mxu0 0.0
    %326 = vmatprep.subr.mxu0 0.0
    %327 = vmatpush1.msra.mxu0 0.0
    %328 = vmatprep.subr.mxu0 0.0
    %329 = vmatpush1.msra.mxu0 0.0
    %330 = vmatprep.mubr.f32.mxu0 0.0
    %331 = vmatmul.mubr.f32.gmra.mrb[0].mxu0 %v165
    %v332 = vpop.f32.mrb[0].mxu0
    %v333 = vadd.f32 %v129, %v332
    %v334 = vpop.f32.mrb[0].mxu0
    %v335 = vadd.f32 %v133, %v334
    %336 = vdwg.mxu0
    %337 = vmatprep.subr.mxu0 %v65
    %338 = vmatpush1.msra.mxu0 %v64
    %339 = vmatprep.subr.mxu0 %v74
    %340 = vmatpush1.msra.mxu0 %v73
    %341 = vmatprep.subr.mxu0 %v83
    %342 = vmatpush1.msra.mxu0 %v82
    %343 = vmatprep.subr.mxu0 %v92
    %344 = vmatpush1.msra.mxu0 %v91
    %345 = vmatprep.subr.mxu0 %v101
    %346 = vmatpush1.msra.mxu0 %v100
    %347 = vmatprep.subr.mxu0 %v184
    %348 = vmatpush1.msra.mxu0 %v181
    %349 = vmatprep.subr.mxu0 0.0
    %350 = vmatpush1.msra.mxu0 0.0
    %351 = vmatprep.subr.mxu0 0.0
    %352 = vmatpush1.msra.mxu0 0.0
    %353 = vmatprep.subr.mxu0 0.0
    %354 = vmatpush1.msra.mxu0 0.0
    %355 = vmatprep.subr.mxu0 0.0
    %356 = vmatpush1.msra.mxu0 0.0
    %357 = vmatprep.subr.mxu0 0.0
    %358 = vmatpush1.msra.mxu0 0.0
    %359 = vmatprep.subr.mxu0 0.0
    %360 = vmatpush1.msra.mxu0 0.0
    %361 = vmatprep.subr.mxu0 0.0
    %362 = vmatpush1.msra.mxu0 0.0
    %363 = vmatprep.subr.mxu0 0.0
    %364 = vmatpush1.msra.mxu0 0.0
    %365 = vmatprep.subr.mxu0 0.0
    %366 = vmatpush1.msra.mxu0 0.0
    %367 = vmatprep.subr.mxu0 0.0
    %368 = vmatpush1.msra.mxu0 0.0
    %369 = vmatprep.subr.mxu0 0.0
    %370 = vmatpush1.msra.mxu0 0.0
    %371 = vmatprep.subr.mxu0 0.0
    %372 = vmatpush1.msra.mxu0 0.0
    %373 = vmatprep.subr.mxu0 0.0
    %374 = vmatpush1.msra.mxu0 0.0
    %375 = vmatprep.subr.mxu0 0.0
    %376 = vmatpush1.msra.mxu0 0.0
    %377 = vmatprep.subr.mxu0 0.0
    %378 = vmatpush1.msra.mxu0 0.0
    %379 = vmatprep.subr.mxu0 0.0
    %380 = vmatpush1.msra.mxu0 0.0
    %381 = vmatprep.subr.mxu0 0.0
    %382 = vmatpush1.msra.mxu0 0.0
    %383 = vmatprep.subr.mxu0 0.0
    %384 = vmatpush1.msra.mxu0 0.0
    %385 = vmatprep.subr.mxu0 0.0
    %386 = vmatpush1.msra.mxu0 0.0
    %387 = vmatprep.subr.mxu0 0.0
    %388 = vmatpush1.msra.mxu0 0.0
    %389 = vmatprep.subr.mxu0 0.0
    %390 = vmatpush1.msra.mxu0 0.0
    %391 = vmatprep.subr.mxu0 0.0
    %392 = vmatpush1.msra.mxu0 0.0
    %393 = vmatprep.subr.mxu0 0.0
    %394 = vmatpush1.msra.mxu0 0.0
    %395 = vmatprep.subr.mxu0 0.0
    %396 = vmatpush1.msra.mxu0 0.0
    %397 = vmatprep.subr.mxu0 0.0
    %398 = vmatpush1.msra.mxu0 0.0
    %399 = vmatprep.subr.mxu0 0.0
    %400 = vmatpush1.msra.mxu0 0.0
    %401 = vmatprep.mubr.f32.mxu0 0.0
    %402 = vmatmul.mubr.f32.gmra.mrb[0].mxu0 %v165
    %v403 = vpop.f32.mrb[0].mxu0
    %v404 = vadd.f32 %v137, %v403
    %v405 = vpop.f32.mrb[0].mxu0
    %v406 = vadd.f32 %v141, %v405
    %407 = vdwg.mxu0
    %408 = vmatprep.subr.mxu0 %v67
    %409 = vmatpush1.msra.mxu0 %v66
    %410 = vmatprep.subr.mxu0 %v76
    %411 = vmatpush1.msra.mxu0 %v75
    %412 = vmatprep.subr.mxu0 %v85
    %413 = vmatpush1.msra.mxu0 %v84
    %414 = vmatprep.subr.mxu0 %v94
    %415 = vmatpush1.msra.mxu0 %v93
    %416 = vmatprep.subr.mxu0 %v103
    %417 = vmatpush1.msra.mxu0 %v102
    %418 = vmatprep.subr.mxu0 %v190
    %419 = vmatpush1.msra.mxu0 %v187
    %420 = vmatprep.subr.mxu0 0.0
    %421 = vmatpush1.msra.mxu0 0.0
    %422 = vmatprep.subr.mxu0 0.0
    %423 = vmatpush1.msra.mxu0 0.0
    %424 = vmatprep.subr.mxu0 0.0
    %425 = vmatpush1.msra.mxu0 0.0
    %426 = vmatprep.subr.mxu0 0.0
    %427 = vmatpush1.msra.mxu0 0.0
    %428 = vmatprep.subr.mxu0 0.0
    %429 = vmatpush1.msra.mxu0 0.0
    %430 = vmatprep.subr.mxu0 0.0
    %431 = vmatpush1.msra.mxu0 0.0
    %432 = vmatprep.subr.mxu0 0.0
    %433 = vmatpush1.msra.mxu0 0.0
    %434 = vmatprep.subr.mxu0 0.0
    %435 = vmatpush1.msra.mxu0 0.0
    %436 = vmatprep.subr.mxu0 0.0
    %437 = vmatpush1.msra.mxu0 0.0
    %438 = vmatprep.subr.mxu0 0.0
    %439 = vmatpush1.msra.mxu0 0.0
    %440 = vmatprep.subr.mxu0 0.0
    %441 = vmatpush1.msra.mxu0 0.0
    %442 = vmatprep.subr.mxu0 0.0
    %443 = vmatpush1.msra.mxu0 0.0
    %444 = vmatprep.subr.mxu0 0.0
    %445 = vmatpush1.msra.mxu0 0.0
    %446 = vmatprep.subr.mxu0 0.0
    %447 = vmatpush1.msra.mxu0 0.0
    %448 = vmatprep.subr.mxu0 0.0
    %449 = vmatpush1.msra.mxu0 0.0
    %450 = vmatprep.subr.mxu0 0.0
    %451 = vmatpush1.msra.mxu0 0.0
    %452 = vmatprep.subr.mxu0 0.0
    %453 = vmatpush1.msra.mxu0 0.0
    %454 = vmatprep.subr.mxu0 0.0
    %455 = vmatpush1.msra.mxu0 0.0
    %456 = vmatprep.subr.mxu0 0.0
    %457 = vmatpush1.msra.mxu0 0.0
    %458 = vmatprep.subr.mxu0 0.0
    %459 = vmatpush1.msra.mxu0 0.0
    %460 = vmatprep.subr.mxu0 0.0
    %461 = vmatpush1.msra.mxu0 0.0
    %462 = vmatprep.subr.mxu0 0.0
    %463 = vmatpush1.msra.mxu0 0.0
    %464 = vmatprep.subr.mxu0 0.0
    %465 = vmatpush1.msra.mxu0 0.0
    %466 = vmatprep.subr.mxu0 0.0
    %467 = vmatpush1.msra.mxu0 0.0
    %468 = vmatprep.subr.mxu0 0.0
    %469 = vmatpush1.msra.mxu0 0.0
    %470 = vmatprep.subr.mxu0 0.0
    %471 = vmatpush1.msra.mxu0 0.0
    %472 = vmatprep.mubr.f32.mxu0 0.0
    %473 = vmatmul.mubr.f32.gmra.mrb[0].mxu0 %v165
    %v474 = vpop.f32.mrb[0].mxu0
    %v475 = vadd.f32 %v145, %v474
    %v476 = vpop.f32.mrb[0].mxu0
    %v477 = vadd.f32 %v149, %v476
    %478 = vdwg.mxu0
    %479 = vmatprep.subr.mxu0 0.0
    %480 = vmatpush1.msra.mxu0 %v68
    %481 = vmatprep.subr.mxu0 0.0
    %482 = vmatpush1.msra.mxu0 %v77
    %483 = vmatprep.subr.mxu0 0.0
    %484 = vmatpush1.msra.mxu0 %v86
    %485 = vmatprep.subr.mxu0 0.0
    %486 = vmatpush1.msra.mxu0 %v95
    %487 = vmatprep.subr.mxu0 0.0
    %488 = vmatpush1.msra.mxu0 %v104
    %489 = vmatprep.subr.mxu0 0.0
    %490 = vmatpush1.msra.mxu0 %v193
    %491 = vmatprep.subr.mxu0 0.0
    %492 = vmatpush1.msra.mxu0 0.0
    %493 = vmatprep.subr.mxu0 0.0
    %494 = vmatpush1.msra.mxu0 0.0
    %495 = vmatprep.subr.mxu0 0.0
    %496 = vmatpush1.msra.mxu0 0.0
    %497 = vmatprep.subr.mxu0 0.0
    %498 = vmatpush1.msra.mxu0 0.0
    %499 = vmatprep.subr.mxu0 0.0
    %500 = vmatpush1.msra.mxu0 0.0
    %501 = vmatprep.subr.mxu0 0.0
    %502 = vmatpush1.msra.mxu0 0.0
    %503 = vmatprep.subr.mxu0 0.0
    %504 = vmatpush1.msra.mxu0 0.0
    %505 = vmatprep.subr.mxu0 0.0
    %506 = vmatpush1.msra.mxu0 0.0
    %507 = vmatprep.subr.mxu0 0.0
    %508 = vmatpush1.msra.mxu0 0.0
    %509 = vmatprep.subr.mxu0 0.0
    %510 = vmatpush1.msra.mxu0 0.0
    %511 = vmatprep.subr.mxu0 0.0
    %512 = vmatpush1.msra.mxu0 0.0
    %513 = vmatprep.subr.mxu0 0.0
    %514 = vmatpush1.msra.mxu0 0.0
    %515 = vmatprep.subr.mxu0 0.0
    %516 = vmatpush1.msra.mxu0 0.0
    %517 = vmatprep.subr.mxu0 0.0
    %518 = vmatpush1.msra.mxu0 0.0
    %519 = vmatprep.subr.mxu0 0.0
    %520 = vmatpush1.msra.mxu0 0.0
    %521 = vmatprep.subr.mxu0 0.0
    %522 = vmatpush1.msra.mxu0 0.0
    %523 = vmatprep.subr.mxu0 0.0
    %524 = vmatpush1.msra.mxu0 0.0
    %525 = vmatprep.subr.mxu0 0.0
    %526 = vmatpush1.msra.mxu0 0.0
    %527 = vmatprep.subr.mxu0 0.0
    %528 = vmatpush1.msra.mxu0 0.0
    %529 = vmatprep.subr.mxu0 0.0
    %530 = vmatpush1.msra.mxu0 0.0
    %531 = vmatprep.subr.mxu0 0.0
    %532 = vmatpush1.msra.mxu0 0.0
    %533 = vmatprep.subr.mxu0 0.0
    %534 = vmatpush1.msra.mxu0 0.0
    %535 = vmatprep.subr.mxu0 0.0
    %536 = vmatpush1.msra.mxu0 0.0
    %537 = vmatprep.subr.mxu0 0.0
    %538 = vmatpush1.msra.mxu0 0.0
    %539 = vmatprep.subr.mxu0 0.0
    %540 = vmatpush1.msra.mxu0 0.0
    %541 = vmatprep.subr.mxu0 0.0
    %542 = vmatpush1.msra.mxu0 0.0
    %543 = vmatprep.mubr.f32.mxu0 0.0
    %544 = vmatmul.mubr.f32.gmra.mrb[0].mxu0 %v165
    %v545 = vpop.f32.mrb[0].mxu0
    %v546 = vadd.f32 %v153, %v545
    %v547 = vpop.f32.mrb[0].mxu0
    %548 = vdwg.mxu0
    %v549 = vxor.u32 %v262, 2147483648
    %v550 = vxor.u32 %v264, 2147483648
    %v551 = vxor.u32 %v333, 2147483648
    %v552 = vxor.u32 %v335, 2147483648
    %v553 = vxor.u32 %v404, 2147483648
    %v554 = vxor.u32 %v406, 2147483648
    %v555 = vxor.u32 %v475, 2147483648
    %v556 = vxor.u32 %v477, 2147483648
    %v557 = vxor.u32 %v546, 2147483648
    %v558 = vmul.f32 %v549, 1.442695
    %v559 = vpow.pop %v558
    %v560 = vmul.f32 %v550, 1.442695
    %v561 = vpow.pop %v560
    %v562 = vmul.f32 %v551, 1.442695
    %v563 = vpow.pop %v562
    %v564 = vmul.f32 %v552, 1.442695
    %v565 = vpow.pop %v564
    %v566 = vmul.f32 %v553, 1.442695
    %v567 = vpow.pop %v566
    %v568 = vmul.f32 %v554, 1.442695
    %v569 = vpow.pop %v568
    %v570 = vmul.f32 %v555, 1.442695
    %v571 = vpow.pop %v570
    %v572 = vmul.f32 %v556, 1.442695
    %v573 = vpow.pop %v572
    %v574 = vmul.f32 %v557, 1.442695
    %v575 = vpow.pop %v574
    %v576 = vadd.f32 %v559, 1.0
    %v577 = vadd.f32 %v561, 1.0
    %v578 = vadd.f32 %v563, 1.0
    %v579 = vadd.f32 %v565, 1.0
    %v580 = vadd.f32 %v567, 1.0
    %v581 = vadd.f32 %v569, 1.0
    %v582 = vadd.f32 %v571, 1.0
    %v583 = vadd.f32 %v573, 1.0
    %v584 = vadd.f32 %v575, 1.0
    %v585 = vrcp.pop %v576
    %v586 = vmul.f32 1.0, %v585
    %v587 = vrcp.pop %v577
    %v588 = vmul.f32 1.0, %v587
    %v589 = vrcp.pop %v578
    %v590 = vmul.f32 1.0, %v589
    %v591 = vrcp.pop %v579
    %v592 = vmul.f32 1.0, %v591
    %v593 = vrcp.pop %v580
    %v594 = vmul.f32 1.0, %v593
    %v595 = vrcp.pop %v581
    %v596 = vmul.f32 1.0, %v595
    %v597 = vrcp.pop %v582
    %v598 = vmul.f32 1.0, %v597
    %v599 = vrcp.pop %v583
    %v600 = vmul.f32 1.0, %v599
    %v601 = vrcp.pop %v584
    %v602 = vmul.f32 1.0, %v601
    %v612 = vcombine.low %v586, %v588
    %v613 = vcombine.low %v590, %v592
    %v614 = vcombine.low %v594, %v596
    %v615 = vcombine.low %v598, %v600
    %v617 = vunpack.c.l.s4 1966171168
    %v618 = vunpack.c.0.s8 %v617
    %v619 = vlaneseq
    %v620 = vshrl.u32 %v619, 7
    %v621 = vsub.s32 %v618, %v620
    %v622 = vrot.slane %v612, %v621
    %v624 = vunpack.c.l.s4 1966171168
    %v625 = vunpack.c.0.s8 %v624
    %v626 = vlaneseq
    %v627 = vshrl.u32 %v626, 7
    %v628 = vsub.s32 %v625, %v627
    %v629 = vrot.slane %v613, %v628
    %v631 = vunpack.c.l.s4 1966171168
    %v632 = vunpack.c.0.s8 %v631
    %v633 = vlaneseq
    %v634 = vshrl.u32 %v633, 7
    %v635 = vsub.s32 %v632, %v634
    %v636 = vrot.slane %v614, %v635
    %v638 = vunpack.c.l.s4 1966171168
    %v639 = vunpack.c.0.s8 %v638
    %v640 = vlaneseq
    %v641 = vshrl.u32 %v640, 7
    %v642 = vsub.s32 %v639, %v641
    %v643 = vrot.slane %v615, %v642
    %v644 = vcombine.low %v622, %v629
    %v645 = vcombine.low %v636, %v643
    %v647 = vunpack.c.l.s4 1966171168
    %v648 = vunpack.c.0.s8 %v647
    %v649 = vlaneseq
    %v650 = vshrl.u32 %v649, 7
    %v651 = vsub.s32 %v648, %v650
    %v652 = vrot.slane %v644, %v651
    %v654 = vunpack.c.l.s4 1966171168
    %v655 = vunpack.c.0.s8 %v654
    %v656 = vlaneseq
    %v657 = vshrl.u32 %v656, 7
    %v658 = vsub.s32 %v655, %v657
    %v659 = vrot.slane %v645, %v658
    %v660 = vcombine.low %v652, %v659
    %v662 = vunpack.c.l.s4 1966171168
    %v663 = vunpack.c.0.s8 %v662
    %v664 = vlaneseq
    %v665 = vshrl.u32 %v664, 7
    %v666 = vsub.s32 %v663, %v665
    %v667 = vrot.slane %v602, %v666
    %v669 = vunpack.c.l.s4 1966171168
    %v670 = vunpack.c.0.s8 %v669
    %v671 = vlaneseq
    %v672 = vshrl.u32 %v671, 7
    %v673 = vsub.s32 %v670, %v672
    %v674 = vrot.slane %v667, %v673
    %677 = vst [vmem:[#allocation5] sm:$0xff] %v660
    %v678 = vlaneseq
    %vm679 = vcmp.ge.s32.totalorder %v678, 0
    %vm680 = vcmp.lt.s32.totalorder %v678, 32
    %vm681 = vmand %vm679, %vm680
    %682 = vst.msk [vmem:[#allocation5 + $0x8] sm:$0x1] %vm681, %v674
    // Predicated region
    $region18: #{conv1x1_sigmoid.1} parent=1 // pred_check
      _
    $region19: #{conv1x1_sigmoid.1} parent=1 // pred_check_branch
      %684 = sbr.rel (0) target = $region21
    $region20: #{conv1x1_sigmoid.1} parent=1 // pred_region
      %s686 = ssub.s32 144, 144
      %687 = vsyncadd [#allocation4], %s686
      %s689 = sshll.u32 [#allocation5], 4
      %s690 = int_to_ptr.vmem [resolvable:$true] %s689
      %692 = dma.vmem_to_hbm [thread:$0]  %s690, 144, %s3, [#allocation4]
    $region21: #{conv1x1_sigmoid.1} parent=1 // pred_fallthru
      _
    // Predicated region
    $region22: #{conv1x1_sigmoid.1} parent=1 // pred_check
      _
    $region23: #{conv1x1_sigmoid.1} parent=1 // pred_check_branch
      %694 = sbr.rel (0) target = $region25
    $region24: #{conv1x1_sigmoid.1} parent=1 // pred_region
      %695 = dma.done [#allocation4], 144
    $region25: #{conv1x1_sigmoid.1} parent=1 // pred_fallthru
      _
    %696 = vsyncpa [#allocation3], 1
    %697 = vsyncpa [#allocation4], 1

</llo_original>
